<compile_context>
chip_gen: v6e
topology: v6e:2x2x1
jax: 0.10.0
libtpu: 0.0.40
codegen_flags: <defaults>
</compile_context>

<pallas_src>
import functools

import jax
import jax.numpy as jnp
import numpy as np
from jax.experimental import pallas as pl
from jax.experimental.pallas import tpu as pltpu


def _round_up(x, m):
    return ((x + m - 1) // m) * m


def _tensorcores_per_chip():
    """1 for v5e/v6e (single TC per chip), 2 otherwise (v7x / unknown)."""
    try:
        kind = jax.devices()[0].device_kind.lower()
    except Exception:
        return 2
    if "v5" in kind or "v6" in kind:
        return 1
    return 2


def poi_emb_kernel(idx_ref,     # (TB, C) int32; col 0 = lon code, col 1 = lat code
                   table_ref,   # (V_tot, H_pad) f32 folded table, VMEM-resident
                   out_ref,     # (TB, H_pad) output block (lane-dense, H_pad % 128 == 0)
                   *, v_lon):
    tb = out_ref.shape[0]
    v_tot = table_ref.shape[0]

    idx = idx_ref[...]
    lon = idx[:, 0:1]                       # (TB, 1), rows [0, V_lon)
    lat = idx[:, 1:2] + v_lon               # (TB, 1), rows [V_lon, V_tot)

    # "Two-hot" selection matrix: row r has a 1 at lon[r] and at lat[r].
    # The two index ranges are disjoint by construction, so logical_or is exact.
    iota = jax.lax.broadcasted_iota(jnp.int32, (tb, v_tot), 1)
    hot = jnp.logical_or(iota == lon, iota == lat).astype(jnp.float32)

    # Single MXU pass gathers lon-row + lat-row (bias pre-folded into lon rows).
    out_ref[...] = jnp.dot(hot, table_ref[...],
                           preferred_element_type=jnp.float32).astype(out_ref.dtype)


def fold_poi_params(lon_table, lat_table, weight, bias):
    """One-time parameter fold.  Call once while Emb/Linear params are fixed.

    Returns (folded_table (V_tot, H_pad) f32, V_lon, H).
    Row-gather from folded_table == gather + concat + Linear of the module.
    """
    v_lon, e = lon_table.shape
    h = weight.shape[0]
    assert weight.shape[1] == 2 * e

    hp = jax.lax.Precision.HIGHEST
    w_lon = jnp.transpose(weight[:, :e]).astype(jnp.float32)   # (E, H)
    w_lat = jnp.transpose(weight[:, e:]).astype(jnp.float32)   # (E, H)
    t_lon = jnp.dot(lon_table.astype(jnp.float32), w_lon, precision=hp)
    t_lon = t_lon + bias.astype(jnp.float32)[None, :]          # fold bias into lon half
    t_lat = jnp.dot(lat_table.astype(jnp.float32), w_lat, precision=hp)
    table = jnp.concatenate([t_lon, t_lat], axis=0)            # (V_tot, H)

    # Pad output columns to a multiple of 128 so kernel stores are lane-dense.
    h_pad = max(128, _round_up(h, 128))
    if h_pad != h:
        table = jnp.pad(table, ((0, 0), (0, h_pad - h)))
    return table, v_lon, h


def poi_embedding_forward(batch_seq_cat, folded_table, v_lon, hid_dim):
    """batch_seq_cat: (B, >=2) int; folded_table from fold_poi_params().

    Returns (B, hid_dim) float32.
    """
    B, C = batch_seq_cat.shape
    assert C >= 2
    v_tot, h_pad = folded_table.shape
    assert h_pad % 128 == 0 and hid_dim <= h_pad

    idx = batch_seq_cat.astype(jnp.int32)

    # Grid selection: 1 step on single-TC chips, num_tc-way split otherwise.
    num_tc = _tensorcores_per_chip()
    if num_tc > 1 and B >= 8 * num_tc:
        tb = _round_up(pl.cdiv(B, num_tc), 8)   # multiple of 8 sublanes
    else:
        tb = B                                  # single grid step
    grid = (pl.cdiv(B, tb),)

    # Explicit VMEM budget: resident table + double-buffered idx/out blocks +
    # the in-kernel hot matrix, with generous headroom.  Capped at 32 MiB so it
    # is valid on every generation (v7x physical VMEM is 64 MiB per TC).
    vmem_need = (_round_up(v_tot, 8) * h_pad * 4
                 + 2 * tb * _round_up(C, 128) * 4
                 + 2 * tb * h_pad * 4
                 + tb * _round_up(v_tot, 128) * 4)
    vmem_limit = int(min(32 << 20, max(4 << 20, 2 * vmem_need)))

    grid_spec = pltpu.PrefetchScalarGridSpec(
        num_scalar_prefetch=0,
        grid=grid,
        in_specs=[
            pl.BlockSpec((tb, C), lambda b: (b, 0)),                 # index block
            pl.BlockSpec(memory_space=pltpu.MemorySpace.VMEM),       # resident folded table
        ],
        out_specs=pl.BlockSpec((tb, h_pad), lambda b: (b, 0)),       # lane-dense output
    )

    out_pad = pl.pallas_call(
        functools.partial(poi_emb_kernel, v_lon=v_lon),
        grid_spec=grid_spec,
        out_shape=jax.ShapeDtypeStruct((B, h_pad), jnp.float32),
        compiler_params=pltpu.CompilerParams(
            dimension_semantics=("parallel",),       # batch tiles are independent
            vmem_limit_bytes=vmem_limit),
    )(idx, folded_table)

    return out_pad[:, :hid_dim]


def reference_forward(batch_seq_cat, lon_table, lat_table, weight, bias):
    lon_e = lon_table[batch_seq_cat[:, 0]]
    lat_e = lat_table[batch_seq_cat[:, 1]]
    sparse_vec = jnp.concatenate([lon_e, lat_e], axis=1)
    return jnp.dot(sparse_vec, weight.T, precision=jax.lax.Precision.HIGHEST) + bias


if __name__ == "__main__":
    # Config / data_feature (small, synthetic):
    emb_dim = 32                 # config['emb_dim']
    hid_dim = 32                 # config['output_dim']
    poi_len_lon_encode = 10      # data_feature['poi_len_lon_encode']
    poi_len_lat_encode = 12      # data_feature['poi_len_lat_encode']
    B = 64                       # batch of POI categorical rows

    key = jax.random.PRNGKey(0)
    k1, k2, k3, k4, k5, k6 = jax.random.split(key, 6)

    # Deterministic parameter init (shapes match nn.Embedding / nn.Linear).
    lon_table = jax.random.normal(k1, (poi_len_lon_encode, emb_dim), jnp.float32)
    lat_table = jax.random.normal(k2, (poi_len_lat_encode, emb_dim), jnp.float32)
    bound = 1.0 / np.sqrt(2 * emb_dim)
    weight = jax.random.uniform(k3, (hid_dim, 2 * emb_dim), jnp.float32, -bound, bound)
    bias = jax.random.uniform(k4, (hid_dim,), jnp.float32, -bound, bound)

    # Input batch of categorical features (B, 2): [lon_code, lat_code]
    lon_ids = jax.random.randint(k5, (B, 1), 0, poi_len_lon_encode, jnp.int32)
    lat_ids = jax.random.randint(k6, (B, 1), 0, poi_len_lat_encode, jnp.int32)
    batch_seq_cat = jnp.concatenate([lon_ids, lat_ids], axis=1)

    # One-time fold (hoisted out of the per-call path).
    folded_table, v_lon, h = fold_poi_params(lon_table, lat_table, weight, bias)
    folded_table = jax.block_until_ready(folded_table)

    out = poi_embedding_forward(batch_seq_cat, folded_table, v_lon, h)
    out = jax.block_until_ready(out)

    ref = reference_forward(batch_seq_cat, lon_table, lat_table, weight, bias)
    np.testing.assert_allclose(np.asarray(out), np.asarray(ref), rtol=1e-5, atol=1e-5)

    print("KERNEL_OK")
</pallas_src>

<mosaic_0001>
module attributes {stable_mosaic.version = 11 : i64} {
  func.func @poi_emb_kernel(%arg0: i32, %arg1: memref<32x2xi32, #tpu.memory_space<vmem>>, %arg2: memref<22x128xf32, #tpu.memory_space<vmem>>, %arg3: memref<32x128xf32, #tpu.memory_space<vmem>>) attributes {dimension_semantics = [#tpu.dimension_semantics<parallel>], iteration_bounds = array<i64: 2>, scalar_prefetch = 0 : i64, scratch_operands = 0 : i64, tpu.core_type = #tpu.core_type<tc>, window_params = [{transform_indices = @transform_0, window_bounds = array<i64: 32, 2>}, {pipeline_mode = #tpu.pipeline_mode<synchronous>, transform_indices = @transform_1, window_bounds = array<i64: 22, 128>}, {transform_indices = @transform_2, window_bounds = array<i64: 32, 128>}]} {
    %c0 = arith.constant 0 : index
    %c0_0 = arith.constant 0 : index
    %0 = vector.load %arg1[%c0, %c0_0] : memref<32x2xi32, #tpu.memory_space<vmem>>, vector<32x2xi32>
    %1 = vector.extract_strided_slice %0 {offsets = [0, 0], sizes = [32, 1], strides = [1, 1]} : vector<32x2xi32> to vector<32x1xi32>
    %2 = vector.extract_strided_slice %0 {offsets = [0, 1], sizes = [32, 1], strides = [1, 1]} : vector<32x2xi32> to vector<32x1xi32>
    %c10_i32 = arith.constant 10 : i32
    %3 = vector.broadcast %c10_i32 : i32 to vector<32x1xi32>
    %4 = arith.addi %2, %3 : vector<32x1xi32>
    %5 = tpu.iota {dimensions = array<i32: 1>} : vector<32x22xi32>
    %6 = vector.broadcast %1 : vector<32x1xi32> to vector<32x22xi32>
    %7 = arith.cmpi eq, %5, %6 : vector<32x22xi32>
    %8 = vector.broadcast %4 : vector<32x1xi32> to vector<32x22xi32>
    %9 = arith.cmpi eq, %5, %8 : vector<32x22xi32>
    %10 = arith.ori %7, %9 : vector<32x22xi1>
    %11 = arith.extui %10 : vector<32x22xi1> to vector<32x22xi32>
    %12 = arith.sitofp %11 : vector<32x22xi32> to vector<32x22xf32>
    %c0_1 = arith.constant 0 : index
    %c0_2 = arith.constant 0 : index
    %13 = vector.load %arg2[%c0_1, %c0_2] : memref<22x128xf32, #tpu.memory_space<vmem>>, vector<22x128xf32>
    %cst = arith.constant dense<0.000000e+00> : vector<32x128xf32>
    %14 = tpu.matmul %12, %13, %cst {dimension_numbers = #tpu.dot_dimension_numbers<[1], [0], [0], [1], [0, 0, 1, 1], [], []>} : vector<32x22xf32>, vector<22x128xf32>, vector<32x128xf32> -> vector<32x128xf32>
    %c0_3 = arith.constant 0 : index
    %c0_4 = arith.constant 0 : index
    %15 = vector.load %arg3[%c0_3, %c0_4] : memref<32x128xf32, #tpu.memory_space<vmem>>, vector<32x128xf32>
    tpu.vector_store %arg3[%c0_3, %c0_4], %14 {strides = array<i32>} : memref<32x128xf32, #tpu.memory_space<vmem>>, vector<32x128xf32>,
    return
  }
  func.func @transform_0(%arg0: i32) -> (i32, i32) {
    %c0_i32 = arith.constant 0 : i32
    %c0_i32_0 = arith.constant 0 : i32
    return %arg0, %c0_i32 : i32, i32
  }
  func.func @transform_1(%arg0: i32) -> (i32, i32) {
    %c0_i32 = arith.constant 0 : i32
    %c0_i32_0 = arith.constant 0 : i32
    %c0_i32_1 = arith.constant 0 : i32
    return %c0_i32, %c0_i32_0 : i32, i32
  }
  func.func @transform_2(%arg0: i32) -> (i32, i32) {
    %c0_i32 = arith.constant 0 : i32
    %c0_i32_0 = arith.constant 0 : i32
    return %arg0, %c0_i32 : i32, i32
  }
}

</mosaic_0001>

<llo_original>
// kernel: tpu_custom_call.1
$region0: #{tpu_custom_call.1}
  #allocation0 [shape = 'u32[]', space=smem, size = 0x4, offset = 0x4, fixed_abs, tag = 'smem constant byte address 0x4 - core index']
  #allocation1 [shape = 'u32[144,128]{1,0:T(1,128)}', space=vmem, size = 0x12000, scoped, tag = 'internal scratch']
  %s0 = inlined_call_operand.vmem [shape: s32[64,2], index: 0, kind: input, shape index: {}]
  %s1 = inlined_call_operand.vmem [shape: f32[22,128], index: 1, kind: input, shape index: {}]
  %s2 = inlined_call_operand.hbm [shape: f32[64,128], index: 2, kind: output, shape index: {}]
  %s3 = sld [smem:[#allocation0]]
  $region41: #{tpu_custom_call.1} parent=0
    _
  %s5 = ssub.s32 1, %s3
  %s6 = scalar_select 0, %s5, %s3
  $region1: #{tpu_custom_call.1} parent=0
    #allocation2 [shape = 'u8[32768]{0}', space=vmem, size = 0x8000, scoped, tag = 'output window, operand 0']
    #allocation3 [shape = 's32[2]{0}', space=sflag, size = 0x8, scoped, tag = 'scoped memory for tpu_custom_call.1']
    %7 = vsyncpa [#allocation3], 0
    %s8 = scalar_lea.sflag [#allocation3], 1
    %9 = vsyncpa %s8, 0
    loop: start=0, step=1, limit=4
    $region2: #{tpu_custom_call.1} parent=1 // loop_pre_header
      _
    $region3: #{tpu_custom_call.1} parent=1 // loop_header
      %s11 = sphi 0, %s15
      %p12 = scmp.ge.s32.totalorder %s11, 4
      %s21 = sphi 0, %s23
      %s24 = sphi 0, %s21
      %s25 = sphi 0, %s24
      %s41 = sphi 0, %s25
      %s45 = sphi 0, %s45
      %s47 = sphi 0, %s45
      %s48 = sphi 0, %s47
      %s62 = sphi 0, %s48
      %s68 = sphi 0, %s70
      %s71 = sphi 0, %s68
      %s72 = sphi 0, %s71
      %s88 = sphi 0, %s72
    $region4: #{tpu_custom_call.1} parent=1 // loop_header_branch
      %14 = sbr.rel (%p12) target = $region8
    $region5: #{tpu_custom_call.1} parent=1 // loop_body
      %s16 = ssub.s32 %s11, 1
      %s17 = ssub.s32 %s11, 2
      %s18 = sadd.s32 %s11, 1
      %s19 = ssub.s32 %s11, %s18
      %p20 = scmp.eq.s32.totalorder %s19, 0
      %s22 = sadd.s32 %s21, 1
      %s23 = scalar_select %p20, %s21, %s22
      %p26 = pneg %p20
      %p27 = scmp.eq.s32.totalorder %s11, 1
      %p28 = por %p26, %p27
      %p29 = scmp.ne.s32.totalorder %s21, %s24
      %p30 = scmp.eq.s32.totalorder %s11, 0
      %p31 = por %p29, %p30
      %p32 = scmp.ne.s32.totalorder %s21, %s24
      %p33 = scmp.eq.s32.totalorder %s16, 1
      %p34 = por %p32, %p33
      %p35 = scmp.ne.s32.totalorder %s24, %s25
      %p36 = scmp.eq.s32.totalorder %s16, 0
      %p37 = por %p35, %p36
      %p38 = scmp.ne.s32.totalorder %s24, %s25
      %p39 = scmp.eq.s32.totalorder %s17, 1
      %p40 = por %p38, %p39
      %p42 = scmp.ne.s32.totalorder %s25, %s41
      %p43 = scmp.eq.s32.totalorder %s17, 0
      %p44 = por %p42, %p43
      %s46 = sadd.s32 %s45, 1
      %p49 = scmp.eq.s32.totalorder %s11, 1
      %p50 = scmp.ne.s32.totalorder %s45, %s47
      %p51 = scmp.eq.s32.totalorder %s11, 0
      %p52 = por %p50, %p51
      %p53 = scmp.ne.s32.totalorder %s45, %s47
      %p54 = scmp.eq.s32.totalorder %s16, 1
      %p55 = por %p53, %p54
      %p56 = scmp.ne.s32.totalorder %s47, %s48
      %p57 = scmp.eq.s32.totalorder %s16, 0
      %p58 = por %p56, %p57
      %p59 = scmp.ne.s32.totalorder %s47, %s48
      %p60 = scmp.eq.s32.totalorder %s17, 1
      %p61 = por %p59, %p60
      %p63 = scmp.ne.s32.totalorder %s48, %s62
      %p64 = scmp.eq.s32.totalorder %s17, 0
      %p65 = por %p63, %p64
      %s66 = ssub.s32 %s11, %s18
      %p67 = scmp.eq.s32.totalorder %s66, 0
      %s69 = sadd.s32 %s68, 1
      %s70 = scalar_select %p67, %s68, %s69
      %p73 = pneg %p67
      %p74 = scmp.eq.s32.totalorder %s11, 1
      %p75 = por %p73, %p74
      %p76 = scmp.ne.s32.totalorder %s68, %s71
      %p77 = scmp.eq.s32.totalorder %s11, 0
      %p78 = por %p76, %p77
      %p79 = scmp.ne.s32.totalorder %s68, %s71
      %p80 = scmp.eq.s32.totalorder %s16, 1
      %p81 = por %p79, %p80
      %p82 = scmp.ne.s32.totalorder %s71, %s72
      %p83 = scmp.eq.s32.totalorder %s16, 0
      %p84 = por %p82, %p83
      %p85 = scmp.ne.s32.totalorder %s71, %s72
      %p86 = scmp.eq.s32.totalorder %s17, 1
      %p87 = por %p85, %p86
      %p89 = scmp.ne.s32.totalorder %s72, %s88
      %p90 = scmp.eq.s32.totalorder %s17, 0
      %p91 = por %p89, %p90
      %p92 = scmp.le.s32.totalorder 1, %s11
      %p93 = scmp.lt.s32.totalorder %s11, 3
      %p94 = pnand %p92, %p93
      %p95 = pneg %p94
      // Predicated region
      $region9: #{tpu_custom_call.1} parent=5 // pred_check
        _
      $region10: #{tpu_custom_call.1} parent=5 // pred_check_branch
        %97 = sbr.rel (%p94) target = $region12
      $region11: #{tpu_custom_call.1} parent=5 // pred_region
        %s98 = ssub.s32 %s11, 1
        // Predicated region
        $region13: #{tpu_custom_call.1} parent=11 // pred_check
          %p99 = pneg %p58
        $region14: #{tpu_custom_call.1} parent=11 // pred_check_branch
          %101 = sbr.rel (%p99) target = $region16
        $region15: #{tpu_custom_call.1} parent=11 // pred_region
          _
        $region16: #{tpu_custom_call.1} parent=11 // pred_fallthru
          _
      $region12: #{tpu_custom_call.1} parent=5 // pred_fallthru
        _
      %p102 = scmp.lt.s32.totalorder %s11, 2
      // Predicated region
      $region17: #{tpu_custom_call.1} parent=5 // pred_check
        %p103 = pneg %p102
      $region18: #{tpu_custom_call.1} parent=5 // pred_check_branch
        %105 = sbr.rel (%p103) target = $region20
      $region19: #{tpu_custom_call.1} parent=5 // pred_region
        // Predicated region
        $region21: #{tpu_custom_call.1} parent=19 // pred_check
          %p106 = pneg %p31
        $region22: #{tpu_custom_call.1} parent=19 // pred_check_branch
          %108 = sbr.rel (%p106) target = $region24
        $region23: #{tpu_custom_call.1} parent=19 // pred_region
          %s109 = smul.u32 4, %s11
          %p110 = scmp.lt.s32.totalorder %s109, 7
          %s111 = scalar_select %p110, %s109, 7
          %s112 = smul.addr %s111, 8
          %s113 = scalar_lea.vmem %s0, %s112
          %s114 = smul.u32 4, %s11
        $region24: #{tpu_custom_call.1} parent=19 // pred_fallthru
          _
      $region20: #{tpu_custom_call.1} parent=5 // pred_fallthru
        _
      %p115 = scmp.le.s32.totalorder 1, %s11
      %p116 = scmp.lt.s32.totalorder %s11, 3
      %p117 = pnand %p115, %p116
      %p118 = pneg %p117
      // Predicated region
      $region25: #{tpu_custom_call.1} parent=5 // pred_check
        _
      $region26: #{tpu_custom_call.1} parent=5 // pred_check_branch
        %120 = sbr.rel (%p117) target = $region28
      $region27: #{tpu_custom_call.1} parent=5 // pred_region
        %s121 = ssub.s32 %s11, 1
        %s122 = smul.u32 4, %s16
        %p123 = scmp.lt.s32.totalorder %s122, 7
        %s124 = scalar_select %p123, %s122, 7
        %s125 = smul.addr %s124, 8
        %s126 = scalar_lea.vmem %s0, %s125
        %p127 = pneg %p37
        %p128 = pneg %p34
        %p129 = pneg %p58
        %p130 = pneg %p55
        %p131 = pneg %p84
        %p132 = pneg %p81
        %s133 = sand.u32 %s71, 1
        %s134 = scalar_lea.sflag [#allocation3], %s133
        %s135 = sand.u32 %s71, 1
        %s136 = smul.addr %s135, 32
        %s137 = scalar_lea.vmem [#allocation2], %s136
        %s138 = smul.u32 4, %s16
        %p139 = scmp.lt.s32.totalorder %s138, 7
        %s140 = scalar_select %p139, %s138, 7
        %s141 = smul.addr %s140, 8
        %s142 = scalar_lea.vmem %s0, %s141
        %s143 = smul.u32 4, %s16
        %s144 = smul.u32 4, %s16
        %v145 = vld [vmem:[%s142] sm:$0xff]
        %v146 = vld [vmem:[%s142 + $0x8] sm:$0xff]
        %v147 = vld [vmem:[%s142 + $0x10] sm:$0xff]
        %v148 = vld [vmem:[%s142 + $0x18] sm:$0xff]
        %v149 = vadd.s32 %v145, 10
        %v150 = vadd.s32 %v146, 10
        %v151 = vadd.s32 %v147, 10
        %v152 = vadd.s32 %v148, 10
        %v153 = vlaneseq
        %v154 = vand.u32 %v153, 127
        %155 = vset.pattern.permute.xlu0 0
        %156 = vperm.xlu0 %155, %v145
        %v157 = vpop.permute.xlu0 %156
        %158 = vset.pattern.permute.xlu0 0
        %159 = vperm.xlu0 %158, %v146
        %v160 = vpop.permute.xlu0 %159
        %161 = vset.pattern.permute.xlu0 0
        %162 = vperm.xlu0 %161, %v147
        %v163 = vpop.permute.xlu0 %162
        %164 = vset.pattern.permute.xlu0 0
        %165 = vperm.xlu0 %164, %v148
        %v166 = vpop.permute.xlu0 %165
        %vm167 = vcmp.eq.s32.totalorder %v154, %v157
        %vm168 = vcmp.eq.s32.totalorder %v154, %v160
        %vm169 = vcmp.eq.s32.totalorder %v154, %v163
        %vm170 = vcmp.eq.s32.totalorder %v154, %v166
        %171 = vset.pattern.permute.xlu0 1
        %172 = vperm.xlu0 %171, %v149
        %v173 = vpop.permute.xlu0 %172
        %174 = vset.pattern.permute.xlu0 1
        %175 = vperm.xlu0 %174, %v150
        %v176 = vpop.permute.xlu0 %175
        %177 = vset.pattern.permute.xlu0 1
        %178 = vperm.xlu0 %177, %v151
        %v179 = vpop.permute.xlu0 %178
        %180 = vset.pattern.permute.xlu0 1
        %181 = vperm.xlu0 %180, %v152
        %v182 = vpop.permute.xlu0 %181
        %vm183 = vcmp.eq.s32.totalorder %v154, %v173
        %vm184 = vcmp.eq.s32.totalorder %v154, %v176
        %vm185 = vcmp.eq.s32.totalorder %v154, %v179
        %vm186 = vcmp.eq.s32.totalorder %v154, %v182
        %vm187 = vmor %vm167, %vm183
        %vm188 = vmor %vm168, %vm184
        %vm189 = vmor %vm169, %vm185
        %vm190 = vmor %vm170, %vm186
        %v191 = vsel %vm187, 1, 0
        %v192 = vsel %vm188, 1, 0
        %v193 = vsel %vm189, 1, 0
        %v194 = vsel %vm190, 1, 0
        %v195 = vcvt.s32.f32 %v191
        %v196 = vcvt.s32.f32 %v192
        %v197 = vcvt.s32.f32 %v193
        %v198 = vcvt.s32.f32 %v194
        %v199 = vld [vmem:[%s1] sm:$0xff]
        %v200 = vld [vmem:[%s1 + $0x8] sm:$0xff]
        %v201 = vld [vmem:[%s1 + $0x10] sm:$0x3f]
        %vm202 = vcmask 179200
        %v204 = vsel %vm202, %v195, 0
        %v207 = vsel %vm202, %v196, 0
        %v210 = vsel %vm202, %v197, 0
        %v213 = vsel %vm202, %v198, 0
        %vm215 = vcmask 1045504
        %v217 = vsel %vm215, %v201, 0
        %219 = vmatprep.subr.mxu0 0.0
        %220 = vmatpush1.msra.mxu0 0.0
        %221 = vmatprep.subr.mxu0 0.0
        %222 = vmatpush1.msra.mxu0 0.0
        %223 = vmatprep.subr.mxu0 0.0
        %224 = vmatpush1.msra.mxu0 0.0
        %225 = vmatprep.subr.mxu0 0.0
        %226 = vmatpush1.msra.mxu0 0.0
        %227 = vmatprep.subr.mxu0 0.0
        %228 = vmatpush1.msra.mxu0 0.0
        %229 = vmatprep.subr.mxu0 0.0
        %230 = vmatpush1.msra.mxu0 0.0
        %231 = vmatprep.subr.mxu0 0.0
        %232 = vmatpush1.msra.mxu0 0.0
        %233 = vmatprep.subr.mxu0 0.0
        %234 = vmatpush1.msra.mxu0 0.0
        %235 = vmatprep.subr.mxu0 0.0
        %236 = vmatpush1.msra.mxu0 0.0
        %237 = vmatprep.subr.mxu0 0.0
        %238 = vmatpush1.msra.mxu0 0.0
        %239 = vmatprep.subr.mxu0 0.0
        %240 = vmatpush1.msra.mxu0 0.0
        %241 = vmatprep.subr.mxu0 0.0
        %242 = vmatpush1.msra.mxu0 0.0
        %243 = vmatprep.subr.mxu0 0.0
        %244 = vmatpush1.msra.mxu0 0.0
        %245 = vmatprep.subr.mxu0 0.0
        %246 = vmatpush1.msra.mxu0 %v217
        %247 = vmatprep.subr.mxu0 0.0
        %248 = vmatpush1.msra.mxu0 %v200
        %249 = vmatprep.subr.mxu0 0.0
        %250 = vmatpush1.msra.mxu0 %v199
        %251 = vmatprep.subr.mxu0 0.0
        %252 = vmatpush2.msra.mxu0 0.0
        %253 = vmatprep.subr.mxu0 0.0
        %254 = vmatpush2.msra.mxu0 0.0
        %255 = vmatprep.subr.mxu0 0.0
        %256 = vmatpush2.msra.mxu0 0.0
        %257 = vmatprep.subr.mxu0 0.0
        %258 = vmatpush2.msra.mxu0 0.0
        %259 = vmatprep.subr.mxu0 0.0
        %260 = vmatpush2.msra.mxu0 0.0
        %261 = vmatprep.subr.mxu0 0.0
        %262 = vmatpush2.msra.mxu0 0.0
        %263 = vmatprep.subr.mxu0 0.0
        %264 = vmatpush2.msra.mxu0 0.0
        %265 = vmatprep.subr.mxu0 0.0
        %266 = vmatpush2.msra.mxu0 0.0
        %267 = vmatprep.subr.mxu0 0.0
        %268 = vmatpush2.msra.mxu0 0.0
        %269 = vmatprep.subr.mxu0 0.0
        %270 = vmatpush2.msra.mxu0 0.0
        %271 = vmatprep.subr.mxu0 0.0
        %272 = vmatpush2.msra.mxu0 0.0
        %273 = vmatprep.subr.mxu0 0.0
        %274 = vmatpush2.msra.mxu0 0.0
        %275 = vmatprep.subr.mxu0 0.0
        %276 = vmatpush2.msra.mxu0 0.0
        %277 = vmatprep.subr.mxu0 0.0
        %278 = vmatpush2.msra.mxu0 0.0
        %279 = vmatprep.subr.mxu0 0.0
        %280 = vmatpush2.msra.mxu0 0.0
        %281 = vmatprep.subr.mxu0 0.0
        %282 = vmatpush2.msra.mxu0 0.0
        %283 = vmatprep.mubr.f32.mxu0 0.0
        %284 = vmatmul.mubr.f32.gmra.mxu0 %v204
        %v285 = vpop.f32.mrf.mxu0
        %v286 = vadd.f32 0.0, %v285
        %v287 = vpop.f32.mrf.mxu0
        %288 = vmatprep.mubr.f32.mxu0 0.0
        %289 = vmatmul.mubr.f32.gmra.mxu0 %v207
        %v290 = vpop.f32.mrf.mxu0
        %v291 = vadd.f32 0.0, %v290
        %v292 = vpop.f32.mrf.mxu0
        %293 = vmatprep.mubr.f32.mxu0 0.0
        %294 = vmatmul.mubr.f32.gmra.mxu0 %v210
        %v295 = vpop.f32.mrf.mxu0
        %v296 = vadd.f32 0.0, %v295
        %v297 = vpop.f32.mrf.mxu0
        %298 = vmatprep.mubr.f32.mxu0 0.0
        %299 = vmatmul.mubr.f32.gmra.mxu0 %v213
        %v300 = vpop.f32.mrf.mxu0
        %v301 = vadd.f32 0.0, %v300
        %v302 = vpop.f32.mrf.mxu0
        %303 = vdwg.mxu0
        %304 = vst [vmem:[%s137] sm:$0xff] %v286
        %305 = vst [vmem:[%s137 + $0x8] sm:$0xff] %v291
        %306 = vst [vmem:[%s137 + $0x10] sm:$0xff] %v296
        %307 = vst [vmem:[%s137 + $0x18] sm:$0xff] %v301
        %s308 = sand.u32 %s71, 1
        %s309 = scalar_lea.sflag [#allocation3], %s308
        %s310 = sand.u32 %s71, 1
        %s311 = smul.addr %s310, 32
        %s312 = scalar_lea.vmem [#allocation2], %s311
        // Predicated region
        $region29: #{tpu_custom_call.1} parent=27 // pred_check
          %p313 = pneg %p81
        $region30: #{tpu_custom_call.1} parent=27 // pred_check_branch
          %315 = sbr.rel (%p313) target = $region32
        $region31: #{tpu_custom_call.1} parent=27 // pred_region
          %s316 = smul.u32 4, %s16
          %s318 = ssub.s32 512, 512
          %319 = vsyncadd %s309, %s318
          %s320 = smul.addr %s316, 128
          %s321 = scalar_lea.hbm %s2, %s320
          %s322 = sshll.u32 %s312, 4
          %s323 = int_to_ptr.vmem [resolvable:$true] %s322
          %328 = dma.vmem_to_hbm [thread:$0]  %s323, 512, %s321, %s309, 128, 128, 8
        $region32: #{tpu_custom_call.1} parent=27 // pred_fallthru
          _
      $region28: #{tpu_custom_call.1} parent=5 // pred_fallthru
        _
      %p329 = scmp.le.s32.totalorder 2, %s11
      // Predicated region
      $region33: #{tpu_custom_call.1} parent=5 // pred_check
        %p330 = pneg %p329
      $region34: #{tpu_custom_call.1} parent=5 // pred_check_branch
        %332 = sbr.rel (%p330) target = $region36
      $region35: #{tpu_custom_call.1} parent=5 // pred_region
        %s333 = ssub.s32 %s11, 2
        // Predicated region
        $region37: #{tpu_custom_call.1} parent=35 // pred_check
          %p334 = pneg %p87
        $region38: #{tpu_custom_call.1} parent=35 // pred_check_branch
          %336 = sbr.rel (%p334) target = $region40
        $region39: #{tpu_custom_call.1} parent=35 // pred_region
          %s337 = sand.u32 %s72, 1
          %s338 = scalar_lea.sflag [#allocation3], %s337
          %s339 = sand.u32 %s72, 1
          %s340 = smul.addr %s339, 32
          %s341 = scalar_lea.vmem [#allocation2], %s340
          %342 = dma.done %s338, 512
        $region40: #{tpu_custom_call.1} parent=35 // pred_fallthru
          _
      $region36: #{tpu_custom_call.1} parent=5 // pred_fallthru
        _
    $region6: #{tpu_custom_call.1} parent=1 // loop_footer
      %s15 = sadd.s32 1, %s11
    $region7: #{tpu_custom_call.1} parent=1 // loop_footer_branch
      %10 = sbr.rel target = $region3
    $region8: #{tpu_custom_call.1} parent=1 // loop_exit
      _
    %343 = vsyncpa [#allocation3], 1
    %s344 = scalar_lea.sflag [#allocation3], 1
    %345 = vsyncpa %s344, 1

</llo_original>
